<compile_context>
chip_gen: v6e
topology: v6e:2x2x1
jax: 0.10.0
libtpu: 0.0.40
codegen_flags: <defaults>
</compile_context>

<pallas_src>
import functools

import jax
import jax.numpy as jnp
from jax.experimental import pallas as pl
from jax.experimental.pallas import tpu as pltpu

LANE = 128            # lane width of a vreg
TM_MAX = 4096         # max rows per block -> 4096*128*4 B = 2 MiB / f32 stream / buffer


def _l1_sum_kernel(*refs, tm, rows, bpp, edge_block, needs_mask, weighted):
    """Sum-only kernel.  Grid = (n_par [parallel], bpp [arbitrary]).

    Accumulates weighted |pred - target| into a full-tile (tm, 128) VMEM
    accumulator (independent per-vreg adds, no per-step cross-lane work);
    folds to a lane-dense (8, 128) partial sum only in the epilogue.
    """
    if weighted:
        pred_ref, tgt_ref, w_ref, out_ref, acc_ref = refs
    else:
        pred_ref, tgt_ref, out_ref, acc_ref = refs
        w_ref = None

    p = pl.program_id(0)        # parallel slice (per-TensorCore on v7x)
    j = pl.program_id(1)        # sequential reduction step within the slice

    @pl.when(j == 0)
    def _():
        acc_ref[...] = jnp.zeros_like(acc_ref)

    x = pred_ref[...].astype(jnp.float32)   # pred.float() in the torch module
    t = tgt_ref[...].astype(jnp.float32)
    l = jnp.abs(x - t)
    if weighted:
        l = l * w_ref[...].astype(jnp.float32)

    if needs_mask:
        g = p * bpp + j                      # global block index

        @pl.when(g < edge_block)             # fully in-bounds: no mask work
        def _():
            acc_ref[...] += l

        @pl.when(g >= edge_block)            # ragged / overhang block(s)
        def _():
            ridx = jax.lax.broadcasted_iota(jnp.int32, (tm, LANE), 0) + g * tm
            acc_ref[...] += jnp.where(ridx < rows, l, 0.0)
    else:
        acc_ref[...] += l

    @pl.when(j == pl.num_programs(1) - 1)
    def _():
        # One sublane fold per parallel slice; unmasked (8,128) store.
        out_ref[...] = jnp.sum(acc_ref[...].reshape(tm // 8, 8, LANE), axis=0)


def _l1_none_kernel(*refs, weighted):
    """Elementwise kernel for reduction='none' (no sum / accumulator work)."""
    if weighted:
        pred_ref, tgt_ref, w_ref, loss_ref = refs
    else:
        pred_ref, tgt_ref, loss_ref = refs
        w_ref = None

    l = jnp.abs(pred_ref[...].astype(jnp.float32)
                - tgt_ref[...].astype(jnp.float32))
    if weighted:
        l = l * w_ref[...].astype(jnp.float32)
    loss_ref[...] = l


def l1_loss(pred, target, weight=None, avg_factor=None,
            reduction="mean", loss_weight=None, tm_max=TM_MAX):
    """Pallas implementation of the L1Loss.forward hot path."""
    assert reduction in ("none", "sum", "mean")
    assert pred.shape == target.shape
    if weight is not None:
        assert weight.shape == pred.shape

    orig_shape = pred.shape
    n_elem = int(pred.size)
    weighted = weight is not None

    # View inputs as a lane-dense (rows, 128) slab.  Free reshape when the
    # element count is already a multiple of 128 (the common NCHW case).
    def _slab(x):
        flat = x.reshape(-1)
        if n_elem % LANE != 0:
            # TODO(synk): ragged element counts pay one host-side pad pass;
            # removing it needs 1-D blocks / manual DMA and is not worth the
            # lowering risk for this loss.
            flat = jnp.pad(flat, (0, LANE - n_elem % LANE))
        return flat.reshape(-1, LANE)

    inputs = [_slab(pred), _slab(target)]
    if weighted:
        inputs.append(_slab(weight))

    rows = inputs[0].shape[0]

    # Sub-32-bit dtypes need more sublanes per tile (bf16 -> 16, int8 -> 32).
    sub = 8
    for x in inputs:
        sub = max(sub, 8 * max(1, 4 // jnp.dtype(x.dtype).itemsize))
    tm = min(tm_max, -(-rows // sub) * sub)
    total_blocks = -(-rows // tm)

    blk_in_bytes = sum(tm * LANE * jnp.dtype(x.dtype).itemsize for x in inputs)

    if reduction == "none":
        vmem_limit = int(2 * blk_in_bytes + 2 * tm * LANE * 4 + (4 << 20))
        loss_slab = pl.pallas_call(
            functools.partial(_l1_none_kernel, weighted=weighted),
            out_shape=jax.ShapeDtypeStruct((rows, LANE), jnp.float32),
            grid_spec=pltpu.PrefetchScalarGridSpec(
                num_scalar_prefetch=0,
                grid=(total_blocks,),
                in_specs=[pl.BlockSpec((tm, LANE), lambda i: (i, 0))
                          for _ in inputs],
                out_specs=pl.BlockSpec((tm, LANE), lambda i: (i, 0)),
            ),
            compiler_params=pltpu.CompilerParams(
                dimension_semantics=("parallel",),
                vmem_limit_bytes=vmem_limit),
        )(*inputs)
        out = loss_slab.reshape(-1)[:n_elem].reshape(orig_shape)
    else:
        # Split blocks over 2 parallel slices whenever possible so both v7x
        # TensorCores stream data; odd block counts get a clamped + masked
        # overhang block.  Harmless (sequential) on v5e/v6e.
        n_par = 2 if total_blocks >= 2 else 1
        bpp = -(-total_blocks // n_par)
        needs_mask = (n_par * bpp * tm) != rows
        edge_block = rows // tm          # first block with any invalid row

        def in_map(p, j):
            # Clamp overhang step(s) onto the last valid block; the in-kernel
            # row mask zeroes their contribution.
            return (jnp.minimum(p * bpp + j, total_blocks - 1), 0)

        vmem_limit = int(2 * blk_in_bytes + tm * LANE * 4
                         + 2 * 8 * LANE * 4 + (4 << 20))
        partials = pl.pallas_call(
            functools.partial(_l1_sum_kernel, tm=tm, rows=rows, bpp=bpp,
                              edge_block=edge_block, needs_mask=needs_mask,
                              weighted=weighted),
            out_shape=jax.ShapeDtypeStruct((n_par * 8, LANE), jnp.float32),
            grid_spec=pltpu.PrefetchScalarGridSpec(
                num_scalar_prefetch=0,
                grid=(n_par, bpp),
                in_specs=[pl.BlockSpec((tm, LANE), in_map) for _ in inputs],
                out_specs=pl.BlockSpec((8, LANE), lambda p, j: (p, 0)),
                scratch_shapes=[pltpu.VMEM((tm, LANE), jnp.float32)],
            ),
            compiler_params=pltpu.CompilerParams(
                # NOTE: if xprof shows one idle TC on v7x, switch the leading
                # axis to pltpu.CORE_PARALLEL.
                dimension_semantics=("parallel", "arbitrary"),
                vmem_limit_bytes=vmem_limit),
        )(*inputs)

        total = jnp.sum(partials)
        if reduction == "sum":
            out = total
        else:  # mean: divide by n_elem, or by avg_factor when provided
            denom = (jnp.float32(n_elem) if avg_factor is None
                     else jnp.asarray(avg_factor, jnp.float32))
            out = total / denom

    if loss_weight is not None:
        out = out * loss_weight
    # TODO(synk): skip_neg_weight / reduce_weight_shape / loss_name dict
    # wrapping are host-side data-dependent branches; not implemented here.
    return out


if __name__ == "__main__":
    key = jax.random.PRNGKey(0)
    k1, k2, k3 = jax.random.split(key, 3)
    shape = (2, 4, 16, 16)
    pred = jax.random.normal(k1, shape, dtype=jnp.float32)
    target = jax.random.normal(k2, shape, dtype=jnp.float32)
    weight = jax.random.uniform(k3, shape, dtype=jnp.float32)

    # default config: reduction='mean', no weight, loss_weight=None
    out_mean = l1_loss(pred, target)
    # weighted, with avg_factor and loss_weight, like detector usage
    out_avg = l1_loss(pred, target, weight=weight, avg_factor=37.5,
                      reduction="mean", loss_weight=2.0)
    out_sum = l1_loss(pred, target, weight=weight, reduction="sum")
    out_none = l1_loss(pred, target, weight=weight, reduction="none")

    # ragged element count -> exercises tail padding + in-kernel row masking
    k4, k5 = jax.random.split(k3)
    p_r = jax.random.normal(k4, (3, 5, 7), dtype=jnp.float32)
    t_r = jax.random.normal(k5, (3, 5, 7), dtype=jnp.float32)
    out_ragged = l1_loss(p_r, t_r, reduction="sum")

    # multi-block case with odd block count -> exercises the 2-way parallel
    # split with a clamped, fully-masked overhang block
    p_b = jax.random.normal(k4, (2, 4, 24, 16), dtype=jnp.float32)
    t_b = jax.random.normal(k5, (2, 4, 24, 16), dtype=jnp.float32)
    out_split = l1_loss(p_b, t_b, reduction="mean", tm_max=8)

    jax.block_until_ready(
        (out_mean, out_avg, out_sum, out_none, out_ragged, out_split))

    # silent correctness checks against pure-JAX reference
    ref = jnp.abs(pred - target)
    assert jnp.allclose(out_mean, ref.mean(), rtol=1e-5, atol=1e-5)
    assert jnp.allclose(out_avg, (ref * weight).sum() / 37.5 * 2.0,
                        rtol=1e-5, atol=1e-5)
    assert jnp.allclose(out_sum, (ref * weight).sum(), rtol=1e-5, atol=1e-5)
    assert jnp.allclose(out_none, ref * weight, rtol=1e-5, atol=1e-5)
    assert jnp.allclose(out_ragged, jnp.abs(p_r - t_r).sum(),
                        rtol=1e-5, atol=1e-5)
    assert jnp.allclose(out_split, jnp.abs(p_b - t_b).mean(),
                        rtol=1e-5, atol=1e-5)

    print("KERNEL_OK")
</pallas_src>

<mosaic_0001>
module attributes {stable_mosaic.version = 11 : i64} {
  func.func @_l1_sum_kernel(%arg0: i32, %arg1: i32, %arg2: memref<16x128xf32, #tpu.memory_space<vmem>>, %arg3: memref<16x128xf32, #tpu.memory_space<vmem>>, %arg4: memref<8x128xf32, #tpu.memory_space<vmem>>, %arg5: memref<16x128xf32, #tpu.memory_space<vmem>>) attributes {dimension_semantics = [#tpu.dimension_semantics<parallel>, #tpu.dimension_semantics<arbitrary>], iteration_bounds = array<i64: 1, 1>, scalar_prefetch = 0 : i64, scratch_operands = 1 : i64, tpu.core_type = #tpu.core_type<tc>, window_params = [{transform_indices = @transform_0, window_bounds = array<i64: 16, 128>}, {transform_indices = @transform_1, window_bounds = array<i64: 16, 128>}, {transform_indices = @transform_2, window_bounds = array<i64: 8, 128>}]} {
    %c0_i32 = arith.constant 0 : i32
    %0 = arith.cmpi eq, %arg1, %c0_i32 : i32
    %1 = arith.extui %0 : i1 to i32
    %c0_i32_0 = arith.constant 0 : i32
    %2 = arith.cmpi ne, %1, %c0_i32_0 : i32
    scf.if %2 {
      %cst = arith.constant 0.000000e+00 : f32
      %13 = vector.broadcast %cst : f32 to vector<16x128xf32>
      %c0_10 = arith.constant 0 : index
      %c0_11 = arith.constant 0 : index
      %14 = vector.load %arg5[%c0_10, %c0_11] : memref<16x128xf32, #tpu.memory_space<vmem>>, vector<16x128xf32>
      tpu.vector_store %arg5[%c0_10, %c0_11], %13 {strides = array<i32>} : memref<16x128xf32, #tpu.memory_space<vmem>>, vector<16x128xf32>,
    } else {
    }
    %c0 = arith.constant 0 : index
    %c0_1 = arith.constant 0 : index
    %3 = vector.load %arg2[%c0, %c0_1] : memref<16x128xf32, #tpu.memory_space<vmem>>, vector<16x128xf32>
    %c0_2 = arith.constant 0 : index
    %c0_3 = arith.constant 0 : index
    %4 = vector.load %arg3[%c0_2, %c0_3] : memref<16x128xf32, #tpu.memory_space<vmem>>, vector<16x128xf32>
    %5 = arith.subf %3, %4 : vector<16x128xf32>
    %6 = math.absf %5 : vector<16x128xf32>
    %c0_4 = arith.constant 0 : index
    %c0_5 = arith.constant 0 : index
    %7 = vector.load %arg5[%c0_4, %c0_5] : memref<16x128xf32, #tpu.memory_space<vmem>>, vector<16x128xf32>
    %8 = arith.addf %7, %6 : vector<16x128xf32>
    %c0_6 = arith.constant 0 : index
    %c0_7 = arith.constant 0 : index
    %9 = vector.load %arg5[%c0_6, %c0_7] : memref<16x128xf32, #tpu.memory_space<vmem>>, vector<16x128xf32>
    tpu.vector_store %arg5[%c0_6, %c0_7], %8 {strides = array<i32>} : memref<16x128xf32, #tpu.memory_space<vmem>>, vector<16x128xf32>,
    %c0_i32_8 = arith.constant 0 : i32
    %10 = arith.cmpi eq, %arg1, %c0_i32_8 : i32
    %11 = arith.extui %10 : i1 to i32
    %c0_i32_9 = arith.constant 0 : i32
    %12 = arith.cmpi ne, %11, %c0_i32_9 : i32
    scf.if %12 {
      %c0_10 = arith.constant 0 : index
      %c0_11 = arith.constant 0 : index
      %13 = vector.load %arg5[%c0_10, %c0_11] : memref<16x128xf32, #tpu.memory_space<vmem>>, vector<16x128xf32>
      %14 = vector.shape_cast %13 : vector<16x128xf32> to vector<2x8x128xf32>
      %cst = arith.constant dense<0.000000e+00> : vector<8x128xf32>
      %15 = vector.multi_reduction <add>, %14, %cst [0] : vector<2x8x128xf32> to vector<8x128xf32>
      %c0_12 = arith.constant 0 : index
      %c0_13 = arith.constant 0 : index
      %16 = vector.load %arg4[%c0_12, %c0_13] : memref<8x128xf32, #tpu.memory_space<vmem>>, vector<8x128xf32>
      tpu.vector_store %arg4[%c0_12, %c0_13], %15 {strides = array<i32>} : memref<8x128xf32, #tpu.memory_space<vmem>>, vector<8x128xf32>,
    } else {
    }
    return
  }
  func.func @transform_0(%arg0: i32, %arg1: i32) -> (i32, i32) {
    %c1_i32 = arith.constant 1 : i32
    %0 = arith.muli %arg0, %c1_i32 : i32
    %1 = arith.addi %0, %arg1 : i32
    %c0_i32 = arith.constant 0 : i32
    %2 = arith.minsi %1, %c0_i32 : i32
    %c0_i32_0 = arith.constant 0 : i32
    %c0_i32_1 = arith.constant 0 : i32
    return %2, %c0_i32_0 : i32, i32
  }
  func.func @transform_1(%arg0: i32, %arg1: i32) -> (i32, i32) {
    %c1_i32 = arith.constant 1 : i32
    %0 = arith.muli %arg0, %c1_i32 : i32
    %1 = arith.addi %0, %arg1 : i32
    %c0_i32 = arith.constant 0 : i32
    %2 = arith.minsi %1, %c0_i32 : i32
    %c0_i32_0 = arith.constant 0 : i32
    %c0_i32_1 = arith.constant 0 : i32
    return %2, %c0_i32_0 : i32, i32
  }
  func.func @transform_2(%arg0: i32, %arg1: i32) -> (i32, i32) {
    %c0_i32 = arith.constant 0 : i32
    %c0_i32_0 = arith.constant 0 : i32
    return %arg0, %c0_i32 : i32, i32
  }
}

</mosaic_0001>

<llo_original>
// kernel: tpu_custom_call.1
$region0: #{tpu_custom_call.1}
  #allocation0 [shape = 'u32[]', space=smem, size = 0x4, offset = 0x4, fixed_abs, tag = 'smem constant byte address 0x4 - core index']
  #allocation1 [shape = 'u32[144,128]{1,0:T(1,128)}', space=vmem, size = 0x12000, scoped, tag = 'internal scratch']
  #allocation2 [shape = 'f32[16,128]{1,0:T(8,128)}', space=vmem, size = 0x2000, scoped, tag = 'scratch operand']
  %s0 = inlined_call_operand.hbm [shape: f32[16,128], index: 0, kind: input, shape index: {}]
  %s1 = inlined_call_operand.hbm [shape: f32[16,128], index: 1, kind: input, shape index: {}]
  %s2 = inlined_call_operand.hbm [shape: f32[8,128], index: 2, kind: output, shape index: {}]
  %s3 = sld [smem:[#allocation0]]
  $region34: #{tpu_custom_call.1} parent=0
    _
  %s5 = ssub.s32 1, %s3
  %s6 = scalar_select 0, %s5, %s3
  $region1: #{tpu_custom_call.1} parent=0
    #allocation3 [shape = 'u8[8192]{0}', space=vmem, size = 0x2000, scoped, tag = 'input window, operand 0, single buffered']
    #allocation4 [shape = 's32[1]{0}', space=sflag, size = 0x4, scoped, tag = 'scoped memory for tpu_custom_call.1']
    #allocation5 [shape = 's32[1]{0}', space=sflag, size = 0x4, scoped, tag = 'scoped memory for tpu_custom_call.1']
    #allocation6 [shape = 'u8[8192]{0}', space=vmem, size = 0x2000, scoped, tag = 'input window, operand 1, single buffered']
    #allocation7 [shape = 's32[1]{0}', space=sflag, size = 0x4, scoped, tag = 'scoped memory for tpu_custom_call.1']
    #allocation8 [shape = 'u8[4096]{0}', space=vmem, size = 0x1000, scoped, tag = 'output window, operand 0, single buffered']
    %7 = vsyncpa [#allocation4], 0
    %8 = vsyncpa [#allocation7], 0
    %9 = vsyncpa [#allocation5], 0
    // Predicated region
    $region2: #{tpu_custom_call.1} parent=1 // pred_check
      _
    $region3: #{tpu_custom_call.1} parent=1 // pred_check_branch
      %11 = sbr.rel (0) target = $region5
    $region4: #{tpu_custom_call.1} parent=1 // pred_region
      %s12 = sadd.s32 0, 0
      %p13 = scmp.lt.s32.totalorder %s12, 0
      %s14 = scalar_select %p13, %s12, 0
      %s15 = smul.u32 2, %s14
      %s17 = ssub.s32 256, 256
      %18 = vsyncadd [#allocation4], %s17
      %s19 = smul.addr %s15, 128
      %s20 = scalar_lea.hbm %s0, %s19
      %s21 = sshll.u32 [#allocation3], 4
      %s22 = int_to_ptr.vmem [resolvable:$true] %s21
      %27 = dma.hbm_to_vmem [thread:$0]  %s20, 256, %s22, [#allocation4], 128, 128, 8
    $region5: #{tpu_custom_call.1} parent=1 // pred_fallthru
      _
    // Predicated region
    $region6: #{tpu_custom_call.1} parent=1 // pred_check
      _
    $region7: #{tpu_custom_call.1} parent=1 // pred_check_branch
      %29 = sbr.rel (0) target = $region9
    $region8: #{tpu_custom_call.1} parent=1 // pred_region
      %s30 = sadd.s32 0, 0
      %p31 = scmp.lt.s32.totalorder %s30, 0
      %s32 = scalar_select %p31, %s30, 0
      %s33 = smul.u32 2, %s32
      %s35 = ssub.s32 256, 256
      %36 = vsyncadd [#allocation7], %s35
      %s37 = smul.addr %s33, 128
      %s38 = scalar_lea.hbm %s1, %s37
      %s39 = sshll.u32 [#allocation6], 4
      %s40 = int_to_ptr.vmem [resolvable:$true] %s39
      %45 = dma.hbm_to_vmem [thread:$0]  %s38, 256, %s40, [#allocation7], 128, 128, 8
    $region9: #{tpu_custom_call.1} parent=1 // pred_fallthru
      _
    // Predicated region
    $region10: #{tpu_custom_call.1} parent=1 // pred_check
      _
    $region11: #{tpu_custom_call.1} parent=1 // pred_check_branch
      %47 = sbr.rel (0) target = $region13
    $region12: #{tpu_custom_call.1} parent=1 // pred_region
      %48 = dma.done [#allocation4], 256
    $region13: #{tpu_custom_call.1} parent=1 // pred_fallthru
      _
    // Predicated region
    $region14: #{tpu_custom_call.1} parent=1 // pred_check
      _
    $region15: #{tpu_custom_call.1} parent=1 // pred_check_branch
      %50 = sbr.rel (0) target = $region17
    $region16: #{tpu_custom_call.1} parent=1 // pred_region
      %51 = dma.done [#allocation7], 256
    $region17: #{tpu_custom_call.1} parent=1 // pred_fallthru
      _
    %s52 = sadd.s32 0, 0
    %p53 = scmp.lt.s32.totalorder %s52, 0
    %s54 = scalar_select %p53, %s52, 0
    %s55 = smul.u32 2, %s54
    %s56 = sadd.s32 0, 0
    %p57 = scmp.lt.s32.totalorder %s56, 0
    %s58 = scalar_select %p57, %s56, 0
    %s59 = smul.u32 2, %s58
    %p60 = scmp.eq.s32.totalorder 0, 0
    // Predicated region
    $region18: #{tpu_custom_call.1} parent=1 // pred_check
      %p61 = pneg %p60
    $region19: #{tpu_custom_call.1} parent=1 // pred_check_branch
      %63 = sbr.rel (%p61) target = $region21
    $region20: #{tpu_custom_call.1} parent=1 // pred_region
      %64 = vst [vmem:[#allocation2] sm:$0xff] 0.0
      %65 = vst [vmem:[#allocation2 + $0x8] sm:$0xff] 0.0
    $region21: #{tpu_custom_call.1} parent=1 // pred_fallthru
      _
    %v66 = vld [vmem:[#allocation3] sm:$0xff]
    %v67 = vld [vmem:[#allocation3 + $0x8] sm:$0xff]
    %v68 = vld [vmem:[#allocation6] sm:$0xff]
    %v69 = vld [vmem:[#allocation6 + $0x8] sm:$0xff]
    %v70 = vsub.f32 %v66, %v68
    %v71 = vsub.f32 %v67, %v69
    %v72 = vand.u32 2147483647, %v70
    %v73 = vand.u32 2147483647, %v71
    %v74 = vld [vmem:[#allocation2] sm:$0xff]
    %v75 = vld [vmem:[#allocation2 + $0x8] sm:$0xff]
    %v76 = vadd.f32 %v74, %v72
    %v77 = vadd.f32 %v75, %v73
    %78 = vst [vmem:[#allocation2] sm:$0xff] %v76
    %79 = vst [vmem:[#allocation2 + $0x8] sm:$0xff] %v77
    // Predicated region
    $region22: #{tpu_custom_call.1} parent=1 // pred_check
      %p80 = pneg %p60
    $region23: #{tpu_custom_call.1} parent=1 // pred_check_branch
      %82 = sbr.rel (%p80) target = $region25
    $region24: #{tpu_custom_call.1} parent=1 // pred_region
      %v83 = vld [vmem:[#allocation2] sm:$0xff]
      %v84 = vld [vmem:[#allocation2 + $0x8] sm:$0xff]
      %v85 = vadd.f32 %v83, %v84
      %86 = vst [vmem:[#allocation8] sm:$0xff] %v85
    $region25: #{tpu_custom_call.1} parent=1 // pred_fallthru
      _
    // Predicated region
    $region26: #{tpu_custom_call.1} parent=1 // pred_check
      _
    $region27: #{tpu_custom_call.1} parent=1 // pred_check_branch
      %88 = sbr.rel (0) target = $region29
    $region28: #{tpu_custom_call.1} parent=1 // pred_region
      %s90 = ssub.s32 128, 128
      %91 = vsyncadd [#allocation5], %s90
      %s93 = sshll.u32 [#allocation8], 4
      %s94 = int_to_ptr.vmem [resolvable:$true] %s93
      %96 = dma.vmem_to_hbm [thread:$0]  %s94, 128, %s2, [#allocation5]
    $region29: #{tpu_custom_call.1} parent=1 // pred_fallthru
      _
    // Predicated region
    $region30: #{tpu_custom_call.1} parent=1 // pred_check
      _
    $region31: #{tpu_custom_call.1} parent=1 // pred_check_branch
      %98 = sbr.rel (0) target = $region33
    $region32: #{tpu_custom_call.1} parent=1 // pred_region
      %99 = dma.done [#allocation5], 128
    $region33: #{tpu_custom_call.1} parent=1 // pred_fallthru
      _
    %100 = vsyncpa [#allocation4], 1
    %101 = vsyncpa [#allocation7], 1
    %102 = vsyncpa [#allocation5], 1

</llo_original>
